<compile_context>
chip_gen: v7x
topology: tpu7x:2x2x1
jax: 0.10.0
libtpu: 0.0.40
codegen_flags: <defaults>
</compile_context>

<pallas_src>
import functools

import jax
import jax.numpy as jnp
from jax.experimental import pallas as pl
from jax.experimental.pallas import tpu as pltpu


# --------------------------------------------------------------------------
# helpers
# --------------------------------------------------------------------------
def _round_up(x, m):
    return ((x + m - 1) // m) * m


def _pad2(x, rows, cols):
    return jnp.pad(x, ((0, rows - x.shape[0]), (0, cols - x.shape[1])))


def _vmem_capacity_bytes():
    """Per-core VMEM capacity; conservative fallback if the query is unavailable."""
    try:
        cap = getattr(pltpu.get_tpu_info(), "vmem_capacity_bytes", None)
        if cap:
            return int(cap)
    except Exception:
        pass
    return 64 * 1024 * 1024  # v7x per-core VMEM (smallest of the three targets)


def _pick_tile(total, target):
    """Largest multiple of 128 that divides `total` and is <= target."""
    best, t = 128, 128
    lim = min(target, total)
    while t <= lim:
        if total % t == 0:
            best = t
        t += 128
    return best


# --------------------------------------------------------------------------
# Fused kernel: the whole GCN stack in a single pallas_call (no grid).
#   For every layer l:  H = maybe_relu( A_hat @ (H @ W_l) + b_l )
# A_hat / H / W / b are all single-buffered, VMEM-resident; A_hat is read
# straight from its input ref in each layer's matmul.
# --------------------------------------------------------------------------
def fused_gcn_kernel(*refs, n_layers):
    a_ref, x_ref = refs[0], refs[1]
    o_ref = refs[2 + 2 * n_layers]
    h = x_ref[...]                                    # [Np, Fp0] bf16
    for l in range(n_layers):
        w = refs[2 + 2 * l][...]                      # [Fp_l, Fp_{l+1}] bf16
        b = refs[3 + 2 * l][...]                      # [1,   Fp_{l+1}] f32
        xw = jnp.dot(h, w, preferred_element_type=jnp.float32)
        hf = jnp.dot(a_ref[...], xw.astype(jnp.bfloat16),
                     preferred_element_type=jnp.float32) + b
        if l != n_layers - 1:
            h = jnp.maximum(hf, 0.0).astype(jnp.bfloat16)
        else:
            o_ref[...] = hf.astype(o_ref.dtype)


def _fused_vmem_bytes(n, in_feats, params):
    """Rough VMEM footprint of the fused path (used for dispatch + vmem limit)."""
    np_ = _round_up(max(n, 128), 128)
    fps = [_round_up(in_feats, 128)] + [_round_up(w.shape[1], 128) for w, _ in params]
    total = np_ * np_ * 2                              # A_hat bf16
    total += np_ * fps[0] * 2                          # X bf16
    total += sum(fps[l] * fps[l + 1] * 2 + fps[l + 1] * 4
                 for l in range(len(params)))          # per-layer W / b
    total += np_ * fps[-1] * 4                         # f32 output
    total += 3 * np_ * max(fps) * 4                    # f32 intermediates headroom
    return total


def _forward_fused(a_hat, in_feat, params):
    n = a_hat.shape[0]
    n_layers = len(params)
    np_ = _round_up(max(n, 128), 128)
    fps = [_round_up(in_feat.shape[1], 128)] + [_round_up(w.shape[1], 128)
                                                for w, _ in params]

    a_p = _pad2(a_hat, np_, np_).astype(jnp.bfloat16)
    x_p = _pad2(in_feat, np_, fps[0]).astype(jnp.bfloat16)
    wb = []
    for l, (w, b) in enumerate(params):
        wb.append(_pad2(w, fps[l], fps[l + 1]).astype(jnp.bfloat16))
        wb.append(_pad2(b, 1, fps[l + 1]).astype(jnp.float32))

    cap = _vmem_capacity_bytes()
    needed = _fused_vmem_bytes(n, in_feat.shape[1], params)
    vmem_limit = int(min(max(needed + (16 << 20), 32 << 20), int(0.9 * cap)))

    # No grid: nothing to pipeline, so every operand is placed in VMEM exactly
    # once (single-buffered) and the whole layer stack runs on-chip.
    return pl.pallas_call(
        functools.partial(fused_gcn_kernel, n_layers=n_layers),
        out_shape=jax.ShapeDtypeStruct((np_, fps[-1]), jnp.float32),
        compiler_params=pltpu.CompilerParams(vmem_limit_bytes=vmem_limit),
    )(a_p, x_p, *wb)


# --------------------------------------------------------------------------
# Tiled path for graphs whose A_hat does not fit in VMEM.
# One pallas_call per layer:
#   grid = (rows: parallel, K reduction: arbitrary)
#   A_hat streamed in (tm, tk) tiles (the only big HBM stream),
#   H / W / b VMEM-resident (constant index maps),
#   XW_k = H[k_tile] @ W computed in-kernel (fused; no XW HBM round-trip),
#   f32 accumulator in VMEM scratch, bias folded into its init.
# --------------------------------------------------------------------------
def gcn_layer_tiled_kernel(a_ref, h_ref, w_ref, b_ref, o_ref, acc_ref,
                           *, tk, apply_relu):
    k = pl.program_id(1)

    @pl.when(k == 0)
    def _():
        # bias folded into the accumulator init (added exactly once per row tile)
        acc_ref[...] = jnp.broadcast_to(b_ref[...], acc_ref.shape).astype(jnp.float32)

    # XW for this K strip, computed from the VMEM-resident H (fused XW stage).
    off = pl.multiple_of(k * tk, 128)
    xw_k = jnp.dot(h_ref[pl.ds(off, tk), :], w_ref[...],
                   preferred_element_type=jnp.float32).astype(jnp.bfloat16)
    acc_ref[...] += jnp.dot(a_ref[...], xw_k, preferred_element_type=jnp.float32)

    @pl.when(k == pl.num_programs(1) - 1)
    def _():
        h = acc_ref[...]
        if apply_relu:
            h = jnp.maximum(h, 0.0)
        o_ref[...] = h.astype(o_ref.dtype)


def _gcn_layer_tiled(a_p, h_p, w, b, apply_relu, *, tm, tk, out_dtype, vmem_limit):
    np_ = a_p.shape[0]
    f_in_p = h_p.shape[1]
    f_out_p = _round_up(w.shape[1], 128)
    w_p = _pad2(w, f_in_p, f_out_p).astype(jnp.bfloat16)
    b_p = _pad2(b, 1, f_out_p).astype(jnp.float32)

    return pl.pallas_call(
        functools.partial(gcn_layer_tiled_kernel, tk=tk, apply_relu=apply_relu),
        out_shape=jax.ShapeDtypeStruct((np_, f_out_p), out_dtype),
        grid=(np_ // tm, np_ // tk),
        in_specs=[
            pl.BlockSpec((tm, tk), lambda i, k: (i, k)),          # A_hat: streamed
            pl.BlockSpec((np_, f_in_p), lambda i, k: (0, 0)),     # H: resident
            pl.BlockSpec((f_in_p, f_out_p), lambda i, k: (0, 0)), # W: resident
            pl.BlockSpec((1, f_out_p), lambda i, k: (0, 0)),      # b: resident
        ],
        out_specs=pl.BlockSpec((tm, f_out_p), lambda i, k: (i, 0)),
        scratch_shapes=[pltpu.VMEM((tm, f_out_p), jnp.float32)],
        compiler_params=pltpu.CompilerParams(
            dimension_semantics=("parallel", "arbitrary"),
            vmem_limit_bytes=vmem_limit),
    )(a_p, h_p, w_p, b_p)


def _forward_tiled(a_hat, in_feat, params):
    n = a_hat.shape[0]
    np_ = _round_up(max(n, 128), 128)          # pad only to lane/tile granularity
    tm = _pick_tile(np_, 512)                  # tiles divide Np exactly
    tk = _pick_tile(np_, 2048)                 # big A tiles: ~2 MiB bf16 per step

    cap = _vmem_capacity_bytes()
    vmem_limit = max(32 << 20, int(min(64 << 20, 0.6 * cap)))

    a_p = _pad2(a_hat, np_, np_).astype(jnp.bfloat16)
    f0 = _round_up(in_feat.shape[1], 128)
    h = _pad2(in_feat, np_, f0).astype(jnp.bfloat16)

    for i, (w, b) in enumerate(params):
        last = (i == len(params) - 1)
        h = _gcn_layer_tiled(a_p, h, w, b, apply_relu=not last,
                             tm=tm, tk=tk,
                             out_dtype=jnp.float32 if last else jnp.bfloat16,
                             vmem_limit=vmem_limit)
    return h


# --------------------------------------------------------------------------
# FlexibleGCN forward: parameter construction (glue) + Pallas layers (hot path)
# --------------------------------------------------------------------------
def init_flexible_gcn(key, in_feats, h_feats, num_classes, n_layers):
    """Deterministic Xavier-uniform weights, zero bias (matches DGL GraphConv init)."""
    if n_layers == 1:
        dims = [(in_feats, num_classes)]
    else:
        dims = [(in_feats, h_feats)]
        dims += [(h_feats, h_feats)] * (n_layers - 2)
        dims += [(h_feats, num_classes)]
    params = []
    for (fi, fo) in dims:
        key, sub = jax.random.split(key)
        limit = (6.0 / (fi + fo)) ** 0.5
        w = jax.random.uniform(sub, (fi, fo), jnp.float32, -limit, limit)
        b = jnp.zeros((1, fo), jnp.float32)
        params.append((w, b))
    return params


def normalized_adjacency(adj):
    """A_hat = D_in^{-1/2} A^T D_out^{-1/2}  (degrees clamped to >= 1, DGL-style)."""
    adj = adj.astype(jnp.float32)
    deg_out = jnp.clip(adj.sum(axis=1), 1.0, None)   # out-degree of source nodes
    deg_in = jnp.clip(adj.sum(axis=0), 1.0, None)    # in-degree of dest nodes
    return (deg_in[:, None] ** -0.5) * adj.T * (deg_out[None, :] ** -0.5)


def flexible_gcn_forward(a_hat, in_feat, params, mode="node", *, path="auto"):
    """path: 'auto' (VMEM-capacity-based dispatch), 'fused', or 'tiled'."""
    n = a_hat.shape[0]
    num_classes = params[-1][0].shape[1]
    if path == "auto":
        needed = _fused_vmem_bytes(n, in_feat.shape[1], params)
        path = "fused" if needed <= int(0.65 * _vmem_capacity_bytes()) else "tiled"
    if path == "fused":
        out_p = _forward_fused(a_hat, in_feat, params)
    else:
        out_p = _forward_tiled(a_hat, in_feat, params)
    out = out_p[:n, :num_classes]
    if mode == "graph":
        # dgl.max_nodes over a single graph == max over the node axis.
        return jnp.max(out, axis=0, keepdims=True)
    return out


def flexible_gcn_reference(a_hat, in_feat, params, mode="node"):
    """Pure-JAX f32 reference for correctness checking."""
    h = in_feat
    for i, (w, b) in enumerate(params):
        h = a_hat @ (h @ w) + b
        if i != len(params) - 1:
            h = jnp.maximum(h, 0.0)
    if mode == "graph":
        return jnp.max(h, axis=0, keepdims=True)
    return h


def _make_graph(key, num_nodes, in_feats, p_edge):
    k_adj, k_feat = jax.random.split(key)
    adj = (jax.random.uniform(k_adj, (num_nodes, num_nodes)) < p_edge).astype(jnp.float32)
    adj = adj * (1.0 - jnp.eye(num_nodes, dtype=jnp.float32))
    a_hat = normalized_adjacency(adj)
    x = jax.random.normal(k_feat, (num_nodes, in_feats), jnp.float32)
    return a_hat, x


if __name__ == "__main__":
    key = jax.random.PRNGKey(0)
    k_small, k_big, k_p1, k_p2 = jax.random.split(key, 4)

    # ---- small graph -> fused single-call, fully VMEM-resident path ----------
    num_nodes, in_feats, h_feats, num_classes, n_layers = 16, 16, 32, 8, 3
    a_hat, x = _make_graph(k_small, num_nodes, in_feats, p_edge=0.3)
    params = init_flexible_gcn(k_p1, in_feats, h_feats, num_classes, n_layers)

    out = jax.block_until_ready(flexible_gcn_forward(a_hat, x, params, mode="node"))
    ref = flexible_gcn_reference(a_hat, x, params, mode="node")
    assert out.shape == (num_nodes, num_classes)
    assert jnp.allclose(out, ref, atol=5e-2, rtol=5e-2), \
        f"fused path mismatch: {jnp.max(jnp.abs(out - ref))}"

    outg = jax.block_until_ready(flexible_gcn_forward(a_hat, x, params, mode="graph"))
    refg = flexible_gcn_reference(a_hat, x, params, mode="graph")
    assert outg.shape == (1, num_classes)
    assert jnp.allclose(outg, refg, atol=5e-2, rtol=5e-2), \
        f"graph-mode mismatch: {jnp.max(jnp.abs(outg - refg))}"

    # ---- larger graph -> exercise the tiled (rows parallel / K arbitrary) path
    n2, f2, h2, c2 = 1024, 64, 128, 16
    a_hat2, x2 = _make_graph(k_big, n2, f2, p_edge=0.01)
    params2 = init_flexible_gcn(k_p2, f2, h2, c2, 3)

    out2 = jax.block_until_ready(
        flexible_gcn_forward(a_hat2, x2, params2, mode="node", path="tiled"))
    ref2 = flexible_gcn_reference(a_hat2, x2, params2, mode="node")
    assert out2.shape == (n2, c2)
    assert jnp.allclose(out2, ref2, atol=5e-2, rtol=5e-2), \
        f"tiled path mismatch: {jnp.max(jnp.abs(out2 - ref2))}"

    print("KERNEL_OK")
</pallas_src>

<mosaic_0001>
module attributes {stable_mosaic.version = 11 : i64} {
  func.func @fused_gcn_kernel(%arg0: memref<128x128xbf16, #tpu.memory_space<vmem>>, %arg1: memref<128x128xbf16, #tpu.memory_space<vmem>>, %arg2: memref<128x128xbf16, #tpu.memory_space<vmem>>, %arg3: memref<1x128xf32, #tpu.memory_space<vmem>>, %arg4: memref<128x128xbf16, #tpu.memory_space<vmem>>, %arg5: memref<1x128xf32, #tpu.memory_space<vmem>>, %arg6: memref<128x128xbf16, #tpu.memory_space<vmem>>, %arg7: memref<1x128xf32, #tpu.memory_space<vmem>>, %arg8: memref<128x128xf32, #tpu.memory_space<vmem>>) attributes {dimension_semantics = [], scalar_prefetch = 0 : i64, scratch_operands = 0 : i64, tpu.core_type = #tpu.core_type<tc>} {
    %c0 = arith.constant 0 : index
    %c0_0 = arith.constant 0 : index
    %0 = vector.load %arg1[%c0, %c0_0] : memref<128x128xbf16, #tpu.memory_space<vmem>>, vector<128x128xbf16>
    %c0_1 = arith.constant 0 : index
    %c0_2 = arith.constant 0 : index
    %1 = vector.load %arg2[%c0_1, %c0_2] : memref<128x128xbf16, #tpu.memory_space<vmem>>, vector<128x128xbf16>
    %c0_3 = arith.constant 0 : index
    %c0_4 = arith.constant 0 : index
    %2 = vector.load %arg3[%c0_3, %c0_4] : memref<1x128xf32, #tpu.memory_space<vmem>>, vector<1x128xf32>
    %cst = arith.constant dense<0.000000e+00> : vector<128x128xf32>
    %3 = tpu.matmul %0, %1, %cst {dimension_numbers = #tpu.dot_dimension_numbers<[1], [0], [0], [1], [0, 0, 1, 1], [], []>} : vector<128x128xbf16>, vector<128x128xbf16>, vector<128x128xf32> -> vector<128x128xf32>
    %c0_5 = arith.constant 0 : index
    %c0_6 = arith.constant 0 : index
    %4 = vector.load %arg0[%c0_5, %c0_6] : memref<128x128xbf16, #tpu.memory_space<vmem>>, vector<128x128xbf16>
    %5 = arith.truncf %3 : vector<128x128xf32> to vector<128x128xbf16>
    %cst_7 = arith.constant dense<0.000000e+00> : vector<128x128xf32>
    %6 = tpu.matmul %4, %5, %cst_7 {dimension_numbers = #tpu.dot_dimension_numbers<[1], [0], [0], [1], [0, 0, 1, 1], [], []>} : vector<128x128xbf16>, vector<128x128xbf16>, vector<128x128xf32> -> vector<128x128xf32>
    %7 = vector.broadcast %2 : vector<1x128xf32> to vector<128x128xf32>
    %8 = arith.addf %6, %7 : vector<128x128xf32>
    %cst_8 = arith.constant 0.000000e+00 : f32
    %9 = vector.broadcast %cst_8 : f32 to vector<128x128xf32>
    %10 = arith.maximumf %8, %9 : vector<128x128xf32>
    %11 = arith.truncf %10 : vector<128x128xf32> to vector<128x128xbf16>
    %c0_9 = arith.constant 0 : index
    %c0_10 = arith.constant 0 : index
    %12 = vector.load %arg4[%c0_9, %c0_10] : memref<128x128xbf16, #tpu.memory_space<vmem>>, vector<128x128xbf16>
    %c0_11 = arith.constant 0 : index
    %c0_12 = arith.constant 0 : index
    %13 = vector.load %arg5[%c0_11, %c0_12] : memref<1x128xf32, #tpu.memory_space<vmem>>, vector<1x128xf32>
    %cst_13 = arith.constant dense<0.000000e+00> : vector<128x128xf32>
    %14 = tpu.matmul %11, %12, %cst_13 {dimension_numbers = #tpu.dot_dimension_numbers<[1], [0], [0], [1], [0, 0, 1, 1], [], []>} : vector<128x128xbf16>, vector<128x128xbf16>, vector<128x128xf32> -> vector<128x128xf32>
    %c0_14 = arith.constant 0 : index
    %c0_15 = arith.constant 0 : index
    %15 = vector.load %arg0[%c0_14, %c0_15] : memref<128x128xbf16, #tpu.memory_space<vmem>>, vector<128x128xbf16>
    %16 = arith.truncf %14 : vector<128x128xf32> to vector<128x128xbf16>
    %cst_16 = arith.constant dense<0.000000e+00> : vector<128x128xf32>
    %17 = tpu.matmul %15, %16, %cst_16 {dimension_numbers = #tpu.dot_dimension_numbers<[1], [0], [0], [1], [0, 0, 1, 1], [], []>} : vector<128x128xbf16>, vector<128x128xbf16>, vector<128x128xf32> -> vector<128x128xf32>
    %18 = vector.broadcast %13 : vector<1x128xf32> to vector<128x128xf32>
    %19 = arith.addf %17, %18 : vector<128x128xf32>
    %cst_17 = arith.constant 0.000000e+00 : f32
    %20 = vector.broadcast %cst_17 : f32 to vector<128x128xf32>
    %21 = arith.maximumf %19, %20 : vector<128x128xf32>
    %22 = arith.truncf %21 : vector<128x128xf32> to vector<128x128xbf16>
    %c0_18 = arith.constant 0 : index
    %c0_19 = arith.constant 0 : index
    %23 = vector.load %arg6[%c0_18, %c0_19] : memref<128x128xbf16, #tpu.memory_space<vmem>>, vector<128x128xbf16>
    %c0_20 = arith.constant 0 : index
    %c0_21 = arith.constant 0 : index
    %24 = vector.load %arg7[%c0_20, %c0_21] : memref<1x128xf32, #tpu.memory_space<vmem>>, vector<1x128xf32>
    %cst_22 = arith.constant dense<0.000000e+00> : vector<128x128xf32>
    %25 = tpu.matmul %22, %23, %cst_22 {dimension_numbers = #tpu.dot_dimension_numbers<[1], [0], [0], [1], [0, 0, 1, 1], [], []>} : vector<128x128xbf16>, vector<128x128xbf16>, vector<128x128xf32> -> vector<128x128xf32>
    %c0_23 = arith.constant 0 : index
    %c0_24 = arith.constant 0 : index
    %26 = vector.load %arg0[%c0_23, %c0_24] : memref<128x128xbf16, #tpu.memory_space<vmem>>, vector<128x128xbf16>
    %27 = arith.truncf %25 : vector<128x128xf32> to vector<128x128xbf16>
    %cst_25 = arith.constant dense<0.000000e+00> : vector<128x128xf32>
    %28 = tpu.matmul %26, %27, %cst_25 {dimension_numbers = #tpu.dot_dimension_numbers<[1], [0], [0], [1], [0, 0, 1, 1], [], []>} : vector<128x128xbf16>, vector<128x128xbf16>, vector<128x128xf32> -> vector<128x128xf32>
    %29 = vector.broadcast %24 : vector<1x128xf32> to vector<128x128xf32>
    %30 = arith.addf %28, %29 : vector<128x128xf32>
    %c0_26 = arith.constant 0 : index
    %c0_27 = arith.constant 0 : index
    %31 = vector.load %arg8[%c0_26, %c0_27] : memref<128x128xf32, #tpu.memory_space<vmem>>, vector<128x128xf32>
    tpu.vector_store %arg8[%c0_26, %c0_27], %30 {strides = array<i32>} : memref<128x128xf32, #tpu.memory_space<vmem>>, vector<128x128xf32>,
    return
  }
}

</mosaic_0001>

<llo_original>
// kernel: tpu_custom_call.1
$region0: #{tpu_custom_call.1}
  #allocation0 [shape = 'u32[]', space=smem, size = 0x4, offset = 0x4, fixed_abs, tag = 'smem constant byte address 0x4 - core index']
  #allocation1 [shape = 'u32[144,128]{1,0:T(1,128)}', space=vmem, size = 0x12000, scoped, tag = 'internal scratch']
  %s0 = inlined_call_operand.hbm [shape: bf16[128,128], index: 0, kind: input, shape index: {}]
  %s1 = inlined_call_operand.hbm [shape: bf16[128,128], index: 1, kind: input, shape index: {}]
  %s2 = inlined_call_operand.hbm [shape: bf16[128,128], index: 2, kind: input, shape index: {}]
  %s3 = inlined_call_operand.vmem [shape: f32[1,128], index: 3, kind: input, shape index: {}]
  %s4 = inlined_call_operand.hbm [shape: bf16[128,128], index: 4, kind: input, shape index: {}]
  %s5 = inlined_call_operand.vmem [shape: f32[1,128], index: 5, kind: input, shape index: {}]
  %s6 = inlined_call_operand.hbm [shape: bf16[128,128], index: 6, kind: input, shape index: {}]
  %s7 = inlined_call_operand.vmem [shape: f32[1,128], index: 7, kind: input, shape index: {}]
  %s8 = inlined_call_operand.hbm [shape: f32[128,128], index: 8, kind: output, shape index: {}]
  %s9 = sld [smem:[#allocation0]]
  $region62: #{tpu_custom_call.1} parent=0
    _
  %s11 = ssub.s32 1, %s9
  %s12 = scalar_select 0, %s11, %s9
  $region1: #{tpu_custom_call.1} parent=0
    #allocation2 [shape = 'u8[32768]{0}', space=vmem, size = 0x8000, scoped, tag = 'input window, operand 0, single buffered']
    #allocation3 [shape = 's32[1]{0}', space=sflag, size = 0x4, scoped, tag = 'scoped memory for tpu_custom_call.1']
    #allocation4 [shape = 's32[1]{0}', space=sflag, size = 0x4, scoped, tag = 'scoped memory for tpu_custom_call.1']
    #allocation5 [shape = 'u8[32768]{0}', space=vmem, size = 0x8000, scoped, tag = 'input window, operand 1, single buffered']
    #allocation6 [shape = 's32[1]{0}', space=sflag, size = 0x4, scoped, tag = 'scoped memory for tpu_custom_call.1']
    #allocation7 [shape = 'u8[32768]{0}', space=vmem, size = 0x8000, scoped, tag = 'input window, operand 2, single buffered']
    #allocation8 [shape = 'u8[32768]{0}', space=vmem, size = 0x8000, scoped, tag = 'input window, operand 4, single buffered']
    #allocation9 [shape = 's32[1]{0}', space=sflag, size = 0x4, scoped, tag = 'scoped memory for tpu_custom_call.1']
    #allocation10 [shape = 'u8[32768]{0}', space=vmem, size = 0x8000, scoped, tag = 'input window, operand 6, single buffered']
    #allocation11 [shape = 'u8[65536]{0}', space=vmem, size = 0x10000, scoped, tag = 'output window, operand 0, single buffered']
    %13 = vsyncpa [#allocation3], 0
    %14 = vsyncpa [#allocation6], 0
    %15 = vsyncpa [#allocation9], 0
    %16 = vsyncpa [#allocation4], 0
    // Predicated region
    $region2: #{tpu_custom_call.1} parent=1 // pred_check
      _
    $region3: #{tpu_custom_call.1} parent=1 // pred_check_branch
      %18 = sbr.rel (0) target = $region5
    $region4: #{tpu_custom_call.1} parent=1 // pred_region
      %s20 = ssub.s32 1024, 1024
      %21 = vsyncadd [#allocation3], %s20
      %s22 = sshll.u32 [#allocation2], 4
      %s23 = int_to_ptr.vmem [resolvable:$true] %s22
      %28 = dma.hbm_to_vmem [thread:$0]  %s0, 1024, %s23, [#allocation3], 64, 64, 4
    $region5: #{tpu_custom_call.1} parent=1 // pred_fallthru
      _
    // Predicated region
    $region6: #{tpu_custom_call.1} parent=1 // pred_check
      _
    $region7: #{tpu_custom_call.1} parent=1 // pred_check_branch
      %30 = sbr.rel (0) target = $region9
    $region8: #{tpu_custom_call.1} parent=1 // pred_region
      %s32 = ssub.s32 1024, 1024
      %33 = vsyncadd [#allocation6], %s32
      %s34 = sshll.u32 [#allocation5], 4
      %s35 = int_to_ptr.vmem [resolvable:$true] %s34
      %40 = dma.hbm_to_vmem [thread:$0]  %s1, 1024, %s35, [#allocation6], 64, 64, 4
    $region9: #{tpu_custom_call.1} parent=1 // pred_fallthru
      _
    // Predicated region
    $region10: #{tpu_custom_call.1} parent=1 // pred_check
      _
    $region11: #{tpu_custom_call.1} parent=1 // pred_check_branch
      %42 = sbr.rel (0) target = $region13
    $region12: #{tpu_custom_call.1} parent=1 // pred_region
      %s44 = ssub.s32 1024, 1024
      %45 = vsyncadd [#allocation6], %s44
      %s46 = sshll.u32 [#allocation7], 4
      %s47 = int_to_ptr.vmem [resolvable:$true] %s46
      %52 = dma.hbm_to_vmem [thread:$0]  %s2, 1024, %s47, [#allocation6], 64, 64, 4
    $region13: #{tpu_custom_call.1} parent=1 // pred_fallthru
      _
    // Predicated region
    $region14: #{tpu_custom_call.1} parent=1 // pred_check
      _
    $region15: #{tpu_custom_call.1} parent=1 // pred_check_branch
      %54 = sbr.rel (0) target = $region17
    $region16: #{tpu_custom_call.1} parent=1 // pred_region
      _
    $region17: #{tpu_custom_call.1} parent=1 // pred_fallthru
      _
    // Predicated region
    $region18: #{tpu_custom_call.1} parent=1 // pred_check
      _
    $region19: #{tpu_custom_call.1} parent=1 // pred_check_branch
      %56 = sbr.rel (0) target = $region21
    $region20: #{tpu_custom_call.1} parent=1 // pred_region
      %s58 = ssub.s32 1024, 1024
      %59 = vsyncadd [#allocation9], %s58
      %s60 = sshll.u32 [#allocation8], 4
      %s61 = int_to_ptr.vmem [resolvable:$true] %s60
      %66 = dma.hbm_to_vmem [thread:$0]  %s4, 1024, %s61, [#allocation9], 64, 64, 4
    $region21: #{tpu_custom_call.1} parent=1 // pred_fallthru
      _
    // Predicated region
    $region22: #{tpu_custom_call.1} parent=1 // pred_check
      _
    $region23: #{tpu_custom_call.1} parent=1 // pred_check_branch
      %68 = sbr.rel (0) target = $region25
    $region24: #{tpu_custom_call.1} parent=1 // pred_region
      _
    $region25: #{tpu_custom_call.1} parent=1 // pred_fallthru
      _
    // Predicated region
    $region26: #{tpu_custom_call.1} parent=1 // pred_check
      _
    $region27: #{tpu_custom_call.1} parent=1 // pred_check_branch
      %70 = sbr.rel (0) target = $region29
    $region28: #{tpu_custom_call.1} parent=1 // pred_region
      %s72 = ssub.s32 1024, 1024
      %73 = vsyncadd [#allocation9], %s72
      %s74 = sshll.u32 [#allocation10], 4
      %s75 = int_to_ptr.vmem [resolvable:$true] %s74
      %80 = dma.hbm_to_vmem [thread:$0]  %s6, 1024, %s75, [#allocation9], 64, 64, 4
    $region29: #{tpu_custom_call.1} parent=1 // pred_fallthru
      _
    // Predicated region
    $region30: #{tpu_custom_call.1} parent=1 // pred_check
      _
    $region31: #{tpu_custom_call.1} parent=1 // pred_check_branch
      %82 = sbr.rel (0) target = $region33
    $region32: #{tpu_custom_call.1} parent=1 // pred_region
      _
    $region33: #{tpu_custom_call.1} parent=1 // pred_fallthru
      _
    // Predicated region
    $region34: #{tpu_custom_call.1} parent=1 // pred_check
      _
    $region35: #{tpu_custom_call.1} parent=1 // pred_check_branch
      %84 = sbr.rel (0) target = $region37
    $region36: #{tpu_custom_call.1} parent=1 // pred_region
      %85 = dma.done [#allocation3], 1024
    $region37: #{tpu_custom_call.1} parent=1 // pred_fallthru
      _
    // Predicated region
    $region38: #{tpu_custom_call.1} parent=1 // pred_check
      _
    $region39: #{tpu_custom_call.1} parent=1 // pred_check_branch
      %87 = sbr.rel (0) target = $region41
    $region40: #{tpu_custom_call.1} parent=1 // pred_region
      %88 = dma.done [#allocation6], 1024
    $region41: #{tpu_custom_call.1} parent=1 // pred_fallthru
      _
    // Predicated region
    $region42: #{tpu_custom_call.1} parent=1 // pred_check
      _
    $region43: #{tpu_custom_call.1} parent=1 // pred_check_branch
      %90 = sbr.rel (0) target = $region45
    $region44: #{tpu_custom_call.1} parent=1 // pred_region
      %91 = dma.done [#allocation6], 1024
    $region45: #{tpu_custom_call.1} parent=1 // pred_fallthru
      _
    // Predicated region
    $region46: #{tpu_custom_call.1} parent=1 // pred_check
      _
    $region47: #{tpu_custom_call.1} parent=1 // pred_check_branch
      %93 = sbr.rel (0) target = $region49
    $region48: #{tpu_custom_call.1} parent=1 // pred_region
      %94 = dma.done [#allocation9], 1024
    $region49: #{tpu_custom_call.1} parent=1 // pred_fallthru
      _
    // Predicated region
    $region50: #{tpu_custom_call.1} parent=1 // pred_check
      _
    $region51: #{tpu_custom_call.1} parent=1 // pred_check_branch
      %96 = sbr.rel (0) target = $region53
    $region52: #{tpu_custom_call.1} parent=1 // pred_region
      %97 = dma.done [#allocation9], 1024
    $region53: #{tpu_custom_call.1} parent=1 // pred_fallthru
      _
    %v99 = vld [vmem:[#allocation5] sm:$0xf]
    %v100 = vld [vmem:[#allocation5 + $0x4] sm:$0xf]
    %v101 = vld [vmem:[#allocation5 + $0x8] sm:$0xf]
    %v102 = vld [vmem:[#allocation5 + $0xc] sm:$0xf]
    %v103 = vld [vmem:[#allocation5 + $0x10] sm:$0xf]
    %v104 = vld [vmem:[#allocation5 + $0x14] sm:$0xf]
    %v105 = vld [vmem:[#allocation5 + $0x18] sm:$0xf]
    %v106 = vld [vmem:[#allocation5 + $0x1c] sm:$0xf]
    %v107 = vld [vmem:[#allocation5 + $0x20] sm:$0xf]
    %v108 = vld [vmem:[#allocation5 + $0x24] sm:$0xf]
    %v109 = vld [vmem:[#allocation5 + $0x28] sm:$0xf]
    %v110 = vld [vmem:[#allocation5 + $0x2c] sm:$0xf]
    %v111 = vld [vmem:[#allocation5 + $0x30] sm:$0xf]
    %v112 = vld [vmem:[#allocation5 + $0x34] sm:$0xf]
    %v113 = vld [vmem:[#allocation5 + $0x38] sm:$0xf]
    %v114 = vld [vmem:[#allocation5 + $0x3c] sm:$0xf]
    %v115 = vld [vmem:[#allocation7] sm:$0xf]
    %v116 = vld [vmem:[#allocation7 + $0x4] sm:$0xf]
    %v117 = vld [vmem:[#allocation7 + $0x8] sm:$0xf]
    %v118 = vld [vmem:[#allocation7 + $0xc] sm:$0xf]
    %v119 = vld [vmem:[#allocation7 + $0x10] sm:$0xf]
    %v120 = vld [vmem:[#allocation7 + $0x14] sm:$0xf]
    %v121 = vld [vmem:[#allocation7 + $0x18] sm:$0xf]
    %v122 = vld [vmem:[#allocation7 + $0x1c] sm:$0xf]
    %v123 = vld [vmem:[#allocation7 + $0x20] sm:$0xf]
    %v124 = vld [vmem:[#allocation7 + $0x24] sm:$0xf]
    %v125 = vld [vmem:[#allocation7 + $0x28] sm:$0xf]
    %v126 = vld [vmem:[#allocation7 + $0x2c] sm:$0xf]
    %v127 = vld [vmem:[#allocation7 + $0x30] sm:$0xf]
    %v128 = vld [vmem:[#allocation7 + $0x34] sm:$0xf]
    %v129 = vld [vmem:[#allocation7 + $0x38] sm:$0xf]
    %v130 = vld [vmem:[#allocation7 + $0x3c] sm:$0xf]
    %v131 = vld [vmem:[%s3] sm:$0x1]
    %v148 = vunpack.c.l.b16 %v99
    %v149 = vunpack.c.l.b16 %v100
    %v150 = vunpack.c.l.b16 %v101
    %v151 = vunpack.c.l.b16 %v102
    %v152 = vunpack.c.l.b16 %v103
    %v153 = vunpack.c.l.b16 %v104
    %v154 = vunpack.c.l.b16 %v105
    %v155 = vunpack.c.l.b16 %v106
    %v156 = vunpack.c.l.b16 %v107
    %v157 = vunpack.c.l.b16 %v108
    %v158 = vunpack.c.l.b16 %v109
    %v159 = vunpack.c.l.b16 %v110
    %v160 = vunpack.c.l.b16 %v111
    %v161 = vunpack.c.l.b16 %v112
    %v162 = vunpack.c.l.b16 %v113
    %v163 = vunpack.c.l.b16 %v114
    %v164 = vpack.c.b16 %v149, %v148
    %v165 = vpack.c.b16 %v151, %v150
    %v166 = vpack.c.b16 %v153, %v152
    %v167 = vpack.c.b16 %v155, %v154
    %v168 = vpack.c.b16 %v157, %v156
    %v169 = vpack.c.b16 %v159, %v158
    %v170 = vpack.c.b16 %v161, %v160
    %v171 = vpack.c.b16 %v163, %v162
    %v196 = vunpack.c.l.b16 %v115
    %v197 = vunpack.c.l.b16 %v116
    %v198 = vunpack.c.l.b16 %v117
    %v199 = vunpack.c.l.b16 %v118
    %v200 = vunpack.c.l.b16 %v119
    %v201 = vunpack.c.l.b16 %v120
    %v202 = vunpack.c.l.b16 %v121
    %v203 = vunpack.c.l.b16 %v122
    %v204 = vunpack.c.l.b16 %v123
    %v205 = vunpack.c.l.b16 %v124
    %v206 = vunpack.c.l.b16 %v125
    %v207 = vunpack.c.l.b16 %v126
    %v208 = vunpack.c.l.b16 %v127
    %v209 = vunpack.c.l.b16 %v128
    %v210 = vunpack.c.l.b16 %v129
    %v211 = vunpack.c.l.b16 %v130
    %v212 = vpack.c.b16 %v197, %v196
    %v213 = vpack.c.b16 %v199, %v198
    %v214 = vpack.c.b16 %v201, %v200
    %v215 = vpack.c.b16 %v203, %v202
    %v216 = vpack.c.b16 %v205, %v204
    %v217 = vpack.c.b16 %v207, %v206
    %v218 = vpack.c.b16 %v209, %v208
    %v219 = vpack.c.b16 %v211, %v210
    %228 = vmatprep.subr.bf16.mxu0 0
    %229 = vmatpush1.bf16.msra.mxu0 %v212
    %230 = vmatprep.subr.bf16.mxu0 0
    %231 = vmatpush1.bf16.msra.mxu0 %v213
    %232 = vmatprep.subr.bf16.mxu0 0
    %233 = vmatpush1.bf16.msra.mxu0 %v214
    %234 = vmatprep.subr.bf16.mxu0 0
    %235 = vmatpush1.bf16.msra.mxu0 %v215
    %236 = vmatprep.subr.bf16.mxu0 0
    %237 = vmatpush1.bf16.msra.mxu0 %v216
    %238 = vmatprep.subr.bf16.mxu0 0
    %239 = vmatpush1.bf16.msra.mxu0 %v217
    %240 = vmatprep.subr.bf16.mxu0 0
    %241 = vmatpush1.bf16.msra.mxu0 %v218
    %242 = vmatprep.subr.bf16.mxu0 0
    %243 = vmatpush1.bf16.msra.mxu0 %v219
    %244 = vmatprep.subr.bf16.mxu0 0
    %245 = vmatpush1.bf16.msra.mxu0 0
    %246 = vmatprep.subr.bf16.mxu0 0
    %247 = vmatpush1.bf16.msra.mxu0 0
    %248 = vmatprep.subr.bf16.mxu0 0
    %249 = vmatpush1.bf16.msra.mxu0 0
    %250 = vmatprep.subr.bf16.mxu0 0
    %251 = vmatpush1.bf16.msra.mxu0 0
    %252 = vmatprep.subr.bf16.mxu0 0
    %253 = vmatpush1.bf16.msra.mxu0 0
    %254 = vmatprep.subr.bf16.mxu0 0
    %255 = vmatpush1.bf16.msra.mxu0 0
    %256 = vmatprep.subr.bf16.mxu0 0
    %257 = vmatpush1.bf16.msra.mxu0 0
    %258 = vmatprep.subr.bf16.mxu0 0
    %259 = vmatpush1.bf16.msra.mxu0 0
    %260 = vmatprep.mubr.bf16.mxu0 0
    %261 = vmatmul.mubr.bf16.gmra.mrb[0].mxu0 %v164
    %v262 = vpop.f32.mrb[0].mxu0
    %v263 = vadd.f32 0.0, %v262
    %v264 = vpop.f32.mrb[0].mxu0
    %v265 = vpop.f32.mrb[0].mxu0
    %v266 = vadd.f32 0.0, %v265
    %v267 = vpop.f32.mrb[0].mxu0
    %268 = vmatprep.mubr.bf16.mxu0 0
    %269 = vmatmul.mubr.bf16.gmra.mrb[0].mxu0 %v165
    %v270 = vpop.f32.mrb[0].mxu0
    %v271 = vadd.f32 0.0, %v270
    %v272 = vpop.f32.mrb[0].mxu0
    %v273 = vpop.f32.mrb[0].mxu0
    %v274 = vadd.f32 0.0, %v273
    %v275 = vpop.f32.mrb[0].mxu0
    %276 = vmatprep.mubr.bf16.mxu0 0
    %277 = vmatmul.mubr.bf16.gmra.mrb[0].mxu0 %v166
    %v278 = vpop.f32.mrb[0].mxu0
    %v279 = vadd.f32 0.0, %v278
    %v280 = vpop.f32.mrb[0].mxu0
    %v281 = vpop.f32.mrb[0].mxu0
    %v282 = vadd.f32 0.0, %v281
    %v283 = vpop.f32.mrb[0].mxu0
    %284 = vmatprep.mubr.bf16.mxu0 0
    %285 = vmatmul.mubr.bf16.gmra.mrb[0].mxu0 %v167
    %v286 = vpop.f32.mrb[0].mxu0
    %v287 = vadd.f32 0.0, %v286
    %v288 = vpop.f32.mrb[0].mxu0
    %v289 = vpop.f32.mrb[0].mxu0
    %v290 = vadd.f32 0.0, %v289
    %v291 = vpop.f32.mrb[0].mxu0
    %292 = vmatprep.mubr.bf16.mxu0 0
    %293 = vmatmul.mubr.bf16.gmra.mrb[0].mxu0 %v168
    %v294 = vpop.f32.mrb[0].mxu0
    %v295 = vadd.f32 0.0, %v294
    %v296 = vpop.f32.mrb[0].mxu0
    %v297 = vpop.f32.mrb[0].mxu0
    %v298 = vadd.f32 0.0, %v297
    %v299 = vpop.f32.mrb[0].mxu0
    %300 = vmatprep.mubr.bf16.mxu0 0
    %301 = vmatmul.mubr.bf16.gmra.mrb[0].mxu0 %v169
    %v302 = vpop.f32.mrb[0].mxu0
    %v303 = vadd.f32 0.0, %v302
    %v304 = vpop.f32.mrb[0].mxu0
    %v305 = vpop.f32.mrb[0].mxu0
    %v306 = vadd.f32 0.0, %v305
    %v307 = vpop.f32.mrb[0].mxu0
    %308 = vmatprep.mubr.bf16.mxu0 0
    %309 = vmatmul.mubr.bf16.gmra.mrb[0].mxu0 %v170
    %v310 = vpop.f32.mrb[0].mxu0
    %v311 = vadd.f32 0.0, %v310
    %v312 = vpop.f32.mrb[0].mxu0
    %v313 = vpop.f32.mrb[0].mxu0
    %v314 = vadd.f32 0.0, %v313
    %v315 = vpop.f32.mrb[0].mxu0
    %316 = vmatprep.mubr.bf16.mxu0 0
    %317 = vmatmul.mubr.bf16.gmra.mrb[0].mxu0 %v171
    %v318 = vpop.f32.mrb[0].mxu0
    %v319 = vadd.f32 0.0, %v318
    %v320 = vpop.f32.mrb[0].mxu0
    %v321 = vpop.f32.mrb[0].mxu0
    %v322 = vadd.f32 0.0, %v321
    %v323 = vpop.f32.mrb[0].mxu0
    %324 = vdwg.mxu0
    %v325 = vld [vmem:[#allocation2] sm:$0xf]
    %v326 = vld [vmem:[#allocation2 + $0x4] sm:$0xf]
    %v327 = vld [vmem:[#allocation2 + $0x8] sm:$0xf]
    %v328 = vld [vmem:[#allocation2 + $0xc] sm:$0xf]
    %v329 = vld [vmem:[#allocation2 + $0x10] sm:$0xf]
    %v330 = vld [vmem:[#allocation2 + $0x14] sm:$0xf]
    %v331 = vld [vmem:[#allocation2 + $0x18] sm:$0xf]
    %v332 = vld [vmem:[#allocation2 + $0x1c] sm:$0xf]
    %v333 = vld [vmem:[#allocation2 + $0x20] sm:$0xf]
    %v334 = vld [vmem:[#allocation2 + $0x24] sm:$0xf]
    %v335 = vld [vmem:[#allocation2 + $0x28] sm:$0xf]
    %v336 = vld [vmem:[#allocation2 + $0x2c] sm:$0xf]
    %v337 = vld [vmem:[#allocation2 + $0x30] sm:$0xf]
    %v338 = vld [vmem:[#allocation2 + $0x34] sm:$0xf]
    %v339 = vld [vmem:[#allocation2 + $0x38] sm:$0xf]
    %v340 = vld [vmem:[#allocation2 + $0x3c] sm:$0xf]
    %v341 = vpack.c.bf16 %v266, %v263
    %v342 = vpack.c.bf16 %v274, %v271
    %v343 = vpack.c.bf16 %v282, %v279
    %v344 = vpack.c.bf16 %v290, %v287
    %v345 = vpack.c.bf16 %v298, %v295
    %v346 = vpack.c.bf16 %v306, %v303
    %v347 = vpack.c.bf16 %v314, %v311
    %v348 = vpack.c.bf16 %v322, %v319
    %v350 = vlaneseq
    %v351 = vshrl.u32 %v350, 7
    %v352 = vsub.s32 0, %v351
    %v353 = vrot.slane %v131, %v352
    %v371 = vunpack.c.l.b16 %v325
    %v372 = vunpack.c.l.b16 %v326
    %v373 = vunpack.c.l.b16 %v327
    %v374 = vunpack.c.l.b16 %v328
    %v375 = vunpack.c.l.b16 %v329
    %v376 = vunpack.c.l.b16 %v330
    %v377 = vunpack.c.l.b16 %v331
    %v378 = vunpack.c.l.b16 %v332
    %v379 = vunpack.c.l.b16 %v333
    %v380 = vunpack.c.l.b16 %v334
    %v381 = vunpack.c.l.b16 %v335
    %v382 = vunpack.c.l.b16 %v336
    %v383 = vunpack.c.l.b16 %v337
    %v384 = vunpack.c.l.b16 %v338
    %v385 = vunpack.c.l.b16 %v339
    %v386 = vunpack.c.l.b16 %v340
    %v387 = vpack.c.b16 %v372, %v371
    %v388 = vpack.c.b16 %v374, %v373
    %v389 = vpack.c.b16 %v376, %v375
    %v390 = vpack.c.b16 %v378, %v377
    %v391 = vpack.c.b16 %v380, %v379
    %v392 = vpack.c.b16 %v382, %v381
    %v393 = vpack.c.b16 %v384, %v383
    %v394 = vpack.c.b16 %v386, %v385
    %403 = vmatprep.subr.bf16.mxu0 0
    %404 = vmatpush1.bf16.msra.mxu0 %v341
    %405 = vmatprep.subr.bf16.mxu0 0
    %406 = vmatpush1.bf16.msra.mxu0 %v342
    %407 = vmatprep.subr.bf16.mxu0 0
    %408 = vmatpush1.bf16.msra.mxu0 %v343
    %409 = vmatprep.subr.bf16.mxu0 0
    %410 = vmatpush1.bf16.msra.mxu0 %v344
    %411 = vmatprep.subr.bf16.mxu0 0
    %412 = vmatpush1.bf16.msra.mxu0 %v345
    %413 = vmatprep.subr.bf16.mxu0 0
    %414 = vmatpush1.bf16.msra.mxu0 %v346
    %415 = vmatprep.subr.bf16.mxu0 0
    %416 = vmatpush1.bf16.msra.mxu0 %v347
    %417 = vmatprep.subr.bf16.mxu0 0
    %418 = vmatpush1.bf16.msra.mxu0 %v348
    %419 = vmatprep.subr.bf16.mxu0 0
    %420 = vmatpush1.bf16.msra.mxu0 0
    %421 = vmatprep.subr.bf16.mxu0 0
    %422 = vmatpush1.bf16.msra.mxu0 0
    %423 = vmatprep.subr.bf16.mxu0 0
    %424 = vmatpush1.bf16.msra.mxu0 0
    %425 = vmatprep.subr.bf16.mxu0 0
    %426 = vmatpush1.bf16.msra.mxu0 0
    %427 = vmatprep.subr.bf16.mxu0 0
    %428 = vmatpush1.bf16.msra.mxu0 0
    %429 = vmatprep.subr.bf16.mxu0 0
    %430 = vmatpush1.bf16.msra.mxu0 0
    %431 = vmatprep.subr.bf16.mxu0 0
    %432 = vmatpush1.bf16.msra.mxu0 0
    %433 = vmatprep.subr.bf16.mxu0 0
    %434 = vmatpush1.bf16.msra.mxu0 0
    %435 = vmatprep.mubr.bf16.mxu0 0
    %436 = vmatmul.mubr.bf16.gmra.mrb[0].mxu0 %v387
    %v437 = vpop.f32.mrb[0].mxu0
    %v438 = vadd.f32 %v353, %v437
    %v439 = vpop.f32.mrb[0].mxu0
    %v440 = vpop.f32.mrb[0].mxu0
    %v441 = vadd.f32 %v353, %v440
    %v442 = vpop.f32.mrb[0].mxu0
    %443 = vmatprep.mubr.bf16.mxu0 0
    %444 = vmatmul.mubr.bf16.gmra.mrb[0].mxu0 %v388
    %v445 = vpop.f32.mrb[0].mxu0
    %v446 = vadd.f32 %v353, %v445
    %v447 = vpop.f32.mrb[0].mxu0
    %v448 = vpop.f32.mrb[0].mxu0
    %v449 = vadd.f32 %v353, %v448
    %v450 = vpop.f32.mrb[0].mxu0
    %451 = vmatprep.mubr.bf16.mxu0 0
    %452 = vmatmul.mubr.bf16.gmra.mrb[0].mxu0 %v389
    %v453 = vpop.f32.mrb[0].mxu0
    %v454 = vadd.f32 %v353, %v453
    %v455 = vpop.f32.mrb[0].mxu0
    %v456 = vpop.f32.mrb[0].mxu0
    %v457 = vadd.f32 %v353, %v456
    %v458 = vpop.f32.mrb[0].mxu0
    %459 = vmatprep.mubr.bf16.mxu0 0
    %460 = vmatmul.mubr.bf16.gmra.mrb[0].mxu0 %v390
    %v461 = vpop.f32.mrb[0].mxu0
    %v462 = vadd.f32 %v353, %v461
    %v463 = vpop.f32.mrb[0].mxu0
    %v464 = vpop.f32.mrb[0].mxu0
    %v465 = vadd.f32 %v353, %v464
    %v466 = vpop.f32.mrb[0].mxu0
    %467 = vmatprep.mubr.bf16.mxu0 0
    %468 = vmatmul.mubr.bf16.gmra.mrb[0].mxu0 %v391
    %v469 = vpop.f32.mrb[0].mxu0
    %v470 = vadd.f32 %v353, %v469
    %v471 = vpop.f32.mrb[0].mxu0
    %v472 = vpop.f32.mrb[0].mxu0
    %v473 = vadd.f32 %v353, %v472
    %v474 = vpop.f32.mrb[0].mxu0
    %475 = vmatprep.mubr.bf16.mxu0 0
    %476 = vmatmul.mubr.bf16.gmra.mrb[0].mxu0 %v392
    %v477 = vpop.f32.mrb[0].mxu0
    %v478 = vadd.f32 %v353, %v477
    %v479 = vpop.f32.mrb[0].mxu0
    %v480 = vpop.f32.mrb[0].mxu0
    %v481 = vadd.f32 %v353, %v480
    %v482 = vpop.f32.mrb[0].mxu0
    %483 = vmatprep.mubr.bf16.mxu0 0
    %484 = vmatmul.mubr.bf16.gmra.mrb[0].mxu0 %v393
    %v485 = vpop.f32.mrb[0].mxu0
    %v486 = vadd.f32 %v353, %v485
    %v487 = vpop.f32.mrb[0].mxu0
    %v488 = vpop.f32.mrb[0].mxu0
    %v489 = vadd.f32 %v353, %v488
    %v490 = vpop.f32.mrb[0].mxu0
    %491 = vmatprep.mubr.bf16.mxu0 0
    %492 = vmatmul.mubr.bf16.gmra.mrb[0].mxu0 %v394
    %v493 = vpop.f32.mrb[0].mxu0
    %v494 = vadd.f32 %v353, %v493
    %v495 = vpop.f32.mrb[0].mxu0
    %v496 = vpop.f32.mrb[0].mxu0
    %v497 = vadd.f32 %v353, %v496
    %v498 = vpop.f32.mrb[0].mxu0
    %499 = vdwg.mxu0
    %v500 = vmax.f32 %v438, 0.0
    %v501 = vmax.f32 %v441, 0.0
    %v502 = vmax.f32 %v446, 0.0
    %v503 = vmax.f32 %v449, 0.0
    %v504 = vmax.f32 %v454, 0.0
    %v505 = vmax.f32 %v457, 0.0
    %v506 = vmax.f32 %v462, 0.0
    %v507 = vmax.f32 %v465, 0.0
    %v508 = vmax.f32 %v470, 0.0
    %v509 = vmax.f32 %v473, 0.0
    %v510 = vmax.f32 %v478, 0.0
    %v511 = vmax.f32 %v481, 0.0
    %v512 = vmax.f32 %v486, 0.0
    %v513 = vmax.f32 %v489, 0.0
    %v514 = vmax.f32 %v494, 0.0
    %v515 = vmax.f32 %v497, 0.0
    %v516 = vpack.c.bf16 %v501, %v500
    %v517 = vpack.c.bf16 %v503, %v502
    %v518 = vpack.c.bf16 %v505, %v504
    %v519 = vpack.c.bf16 %v507, %v506
    %v520 = vpack.c.bf16 %v509, %v508
    %v521 = vpack.c.bf16 %v511, %v510
    %v522 = vpack.c.bf16 %v513, %v512
    %v523 = vpack.c.bf16 %v515, %v514
    %v524 = vld [vmem:[#allocation8] sm:$0xf]
    %v525 = vld [vmem:[#allocation8 + $0x4] sm:$0xf]
    %v526 = vld [vmem:[#allocation8 + $0x8] sm:$0xf]
    %v527 = vld [vmem:[#allocation8 + $0xc] sm:$0xf]
    %v528 = vld [vmem:[#allocation8 + $0x10] sm:$0xf]
    %v529 = vld [vmem:[#allocation8 + $0x14] sm:$0xf]
    %v530 = vld [vmem:[#allocation8 + $0x18] sm:$0xf]
    %v531 = vld [vmem:[#allocation8 + $0x1c] sm:$0xf]
    %v532 = vld [vmem:[#allocation8 + $0x20] sm:$0xf]
    %v533 = vld [vmem:[#allocation8 + $0x24] sm:$0xf]
    %v534 = vld [vmem:[#allocation8 + $0x28] sm:$0xf]
    %v535 = vld [vmem:[#allocation8 + $0x2c] sm:$0xf]
    %v536 = vld [vmem:[#allocation8 + $0x30] sm:$0xf]
    %v537 = vld [vmem:[#allocation8 + $0x34] sm:$0xf]
    %v538 = vld [vmem:[#allocation8 + $0x38] sm:$0xf]
    %v539 = vld [vmem:[#allocation8 + $0x3c] sm:$0xf]
    %v540 = vld [vmem:[%s5] sm:$0x1]
    %v557 = vunpack.c.l.b16 %v524
    %v558 = vunpack.c.l.b16 %v525
    %v559 = vunpack.c.l.b16 %v526
    %v560 = vunpack.c.l.b16 %v527
    %v561 = vunpack.c.l.b16 %v528
    %v562 = vunpack.c.l.b16 %v529
    %v563 = vunpack.c.l.b16 %v530
    %v564 = vunpack.c.l.b16 %v531
    %v565 = vunpack.c.l.b16 %v532
    %v566 = vunpack.c.l.b16 %v533
    %v567 = vunpack.c.l.b16 %v534
    %v568 = vunpack.c.l.b16 %v535
    %v569 = vunpack.c.l.b16 %v536
    %v570 = vunpack.c.l.b16 %v537
    %v571 = vunpack.c.l.b16 %v538
    %v572 = vunpack.c.l.b16 %v539
    %v573 = vpack.c.b16 %v558, %v557
    %v574 = vpack.c.b16 %v560, %v559
    %v575 = vpack.c.b16 %v562, %v561
    %v576 = vpack.c.b16 %v564, %v563
    %v577 = vpack.c.b16 %v566, %v565
    %v578 = vpack.c.b16 %v568, %v567
    %v579 = vpack.c.b16 %v570, %v569
    %v580 = vpack.c.b16 %v572, %v571
    %589 = vmatprep.subr.bf16.mxu0 0
    %590 = vmatpush1.bf16.msra.mxu0 %v573
    %591 = vmatprep.subr.bf16.mxu0 0
    %592 = vmatpush1.bf16.msra.mxu0 %v574
    %593 = vmatprep.subr.bf16.mxu0 0
    %594 = vmatpush1.bf16.msra.mxu0 %v575
    %595 = vmatprep.subr.bf16.mxu0 0
    %596 = vmatpush1.bf16.msra.mxu0 %v576
    %597 = vmatprep.subr.bf16.mxu0 0
    %598 = vmatpush1.bf16.msra.mxu0 %v577
    %599 = vmatprep.subr.bf16.mxu0 0
    %600 = vmatpush1.bf16.msra.mxu0 %v578
    %601 = vmatprep.subr.bf16.mxu0 0
    %602 = vmatpush1.bf16.msra.mxu0 %v579
    %603 = vmatprep.subr.bf16.mxu0 0
    %604 = vmatpush1.bf16.msra.mxu0 %v580
    %605 = vmatprep.subr.bf16.mxu0 0
    %606 = vmatpush1.bf16.msra.mxu0 0
    %607 = vmatprep.subr.bf16.mxu0 0
    %608 = vmatpush1.bf16.msra.mxu0 0
    %609 = vmatprep.subr.bf16.mxu0 0
    %610 = vmatpush1.bf16.msra.mxu0 0
    %611 = vmatprep.subr.bf16.mxu0 0
    %612 = vmatpush1.bf16.msra.mxu0 0
    %613 = vmatprep.subr.bf16.mxu0 0
    %614 = vmatpush1.bf16.msra.mxu0 0
    %615 = vmatprep.subr.bf16.mxu0 0
    %616 = vmatpush1.bf16.msra.mxu0 0
    %617 = vmatprep.subr.bf16.mxu0 0
    %618 = vmatpush1.bf16.msra.mxu0 0
    %619 = vmatprep.subr.bf16.mxu0 0
    %620 = vmatpush1.bf16.msra.mxu0 0
    %621 = vmatprep.mubr.bf16.mxu0 0
    %622 = vmatmul.mubr.bf16.gmra.mrb[0].mxu0 %v516
    %v623 = vpop.f32.mrb[0].mxu0
    %v624 = vadd.f32 0.0, %v623
    %v625 = vpop.f32.mrb[0].mxu0
    %v626 = vpop.f32.mrb[0].mxu0
    %v627 = vadd.f32 0.0, %v626
    %v628 = vpop.f32.mrb[0].mxu0
    %629 = vmatprep.mubr.bf16.mxu0 0
    %630 = vmatmul.mubr.bf16.gmra.mrb[0].mxu0 %v517
    %v631 = vpop.f32.mrb[0].mxu0
    %v632 = vadd.f32 0.0, %v631
    %v633 = vpop.f32.mrb[0].mxu0
    %v634 = vpop.f32.mrb[0].mxu0
    %v635 = vadd.f32 0.0, %v634
    %v636 = vpop.f32.mrb[0].mxu0
    %637 = vmatprep.mubr.bf16.mxu0 0
    %638 = vmatmul.mubr.bf16.gmra.mrb[0].mxu0 %v518
    %v639 = vpop.f32.mrb[0].mxu0
    %v640 = vadd.f32 0.0, %v639
    %v641 = vpop.f32.mrb[0].mxu0
    %v642 = vpop.f32.mrb[0].mxu0
    %v643 = vadd.f32 0.0, %v642
    %v644 = vpop.f32.mrb[0].mxu0
    %645 = vmatprep.mubr.bf16.mxu0 0
    %646 = vmatmul.mubr.bf16.gmra.mrb[0].mxu0 %v519
    %v647 = vpop.f32.mrb[0].mxu0
    %v648 = vadd.f32 0.0, %v647
    %v649 = vpop.f32.mrb[0].mxu0
    %v650 = vpop.f32.mrb[0].mxu0
    %v651 = vadd.f32 0.0, %v650
    %v652 = vpop.f32.mrb[0].mxu0
    %653 = vmatprep.mubr.bf16.mxu0 0
    %654 = vmatmul.mubr.bf16.gmra.mrb[0].mxu0 %v520
    %v655 = vpop.f32.mrb[0].mxu0
    %v656 = vadd.f32 0.0, %v655
    %v657 = vpop.f32.mrb[0].mxu0
    %v658 = vpop.f32.mrb[0].mxu0
    %v659 = vadd.f32 0.0, %v658
    %v660 = vpop.f32.mrb[0].mxu0
    %661 = vmatprep.mubr.bf16.mxu0 0
    %662 = vmatmul.mubr.bf16.gmra.mrb[0].mxu0 %v521
    %v663 = vpop.f32.mrb[0].mxu0
    %v664 = vadd.f32 0.0, %v663
    %v665 = vpop.f32.mrb[0].mxu0
    %v666 = vpop.f32.mrb[0].mxu0
    %v667 = vadd.f32 0.0, %v666
    %v668 = vpop.f32.mrb[0].mxu0
    %669 = vmatprep.mubr.bf16.mxu0 0
    %670 = vmatmul.mubr.bf16.gmra.mrb[0].mxu0 %v522
    %v671 = vpop.f32.mrb[0].mxu0
    %v672 = vadd.f32 0.0, %v671
    %v673 = vpop.f32.mrb[0].mxu0
    %v674 = vpop.f32.mrb[0].mxu0
    %v675 = vadd.f32 0.0, %v674
    %v676 = vpop.f32.mrb[0].mxu0
    %677 = vmatprep.mubr.bf16.mxu0 0
    %678 = vmatmul.mubr.bf16.gmra.mrb[0].mxu0 %v523
    %v679 = vpop.f32.mrb[0].mxu0
    %v680 = vadd.f32 0.0, %v679
    %v681 = vpop.f32.mrb[0].mxu0
    %v682 = vpop.f32.mrb[0].mxu0
    %v683 = vadd.f32 0.0, %v682
    %v684 = vpop.f32.mrb[0].mxu0
    %685 = vdwg.mxu0
    %v686 = vpack.c.bf16 %v627, %v624
    %v687 = vpack.c.bf16 %v635, %v632
    %v688 = vpack.c.bf16 %v643, %v640
    %v689 = vpack.c.bf16 %v651, %v648
    %v690 = vpack.c.bf16 %v659, %v656
    %v691 = vpack.c.bf16 %v667, %v664
    %v692 = vpack.c.bf16 %v675, %v672
    %v693 = vpack.c.bf16 %v683, %v680
    %v695 = vlaneseq
    %v696 = vshrl.u32 %v695, 7
    %v697 = vsub.s32 0, %v696
    %v698 = vrot.slane %v540, %v697
    %700 = vmatprep.subr.bf16.mxu0 0
    %701 = vmatpush1.bf16.msra.mxu0 %v686
    %702 = vmatprep.subr.bf16.mxu0 0
    %703 = vmatpush1.bf16.msra.mxu0 %v687
    %704 = vmatprep.subr.bf16.mxu0 0
    %705 = vmatpush1.bf16.msra.mxu0 %v688
    %706 = vmatprep.subr.bf16.mxu0 0
    %707 = vmatpush1.bf16.msra.mxu0 %v689
    %708 = vmatprep.subr.bf16.mxu0 0
    %709 = vmatpush1.bf16.msra.mxu0 %v690
    %710 = vmatprep.subr.bf16.mxu0 0
    %711 = vmatpush1.bf16.msra.mxu0 %v691
    %712 = vmatprep.subr.bf16.mxu0 0
    %713 = vmatpush1.bf16.msra.mxu0 %v692
    %714 = vmatprep.subr.bf16.mxu0 0
    %715 = vmatpush1.bf16.msra.mxu0 %v693
    %716 = vmatprep.subr.bf16.mxu0 0
    %717 = vmatpush1.bf16.msra.mxu0 0
    %718 = vmatprep.subr.bf16.mxu0 0
    %719 = vmatpush1.bf16.msra.mxu0 0
    %720 = vmatprep.subr.bf16.mxu0 0
    %721 = vmatpush1.bf16.msra.mxu0 0
    %722 = vmatprep.subr.bf16.mxu0 0
    %723 = vmatpush1.bf16.msra.mxu0 0
    %724 = vmatprep.subr.bf16.mxu0 0
    %725 = vmatpush1.bf16.msra.mxu0 0
    %726 = vmatprep.subr.bf16.mxu0 0
    %727 = vmatpush1.bf16.msra.mxu0 0
    %728 = vmatprep.subr.bf16.mxu0 0
    %729 = vmatpush1.bf16.msra.mxu0 0
    %730 = vmatprep.subr.bf16.mxu0 0
    %731 = vmatpush1.bf16.msra.mxu0 0
    %732 = vmatprep.mubr.bf16.mxu0 0
    %733 = vmatmul.mubr.bf16.gmra.mrb[0].mxu0 %v387
    %v734 = vpop.f32.mrb[0].mxu0
    %v735 = vadd.f32 %v698, %v734
    %v736 = vpop.f32.mrb[0].mxu0
    %v737 = vpop.f32.mrb[0].mxu0
    %v738 = vadd.f32 %v698, %v737
    %v739 = vpop.f32.mrb[0].mxu0
    %740 = vmatprep.mubr.bf16.mxu0 0
    %741 = vmatmul.mubr.bf16.gmra.mrb[0].mxu0 %v388
    %v742 = vpop.f32.mrb[0].mxu0
    %v743 = vadd.f32 %v698, %v742
    %v744 = vpop.f32.mrb[0].mxu0
    %v745 = vpop.f32.mrb[0].mxu0
    %v746 = vadd.f32 %v698, %v745
    %v747 = vpop.f32.mrb[0].mxu0
    %748 = vmatprep.mubr.bf16.mxu0 0
    %749 = vmatmul.mubr.bf16.gmra.mrb[0].mxu0 %v389
    %v750 = vpop.f32.mrb[0].mxu0
    %v751 = vadd.f32 %v698, %v750
    %v752 = vpop.f32.mrb[0].mxu0
    %v753 = vpop.f32.mrb[0].mxu0
    %v754 = vadd.f32 %v698, %v753
    %v755 = vpop.f32.mrb[0].mxu0
    %756 = vmatprep.mubr.bf16.mxu0 0
    %757 = vmatmul.mubr.bf16.gmra.mrb[0].mxu0 %v390
    %v758 = vpop.f32.mrb[0].mxu0
    %v759 = vadd.f32 %v698, %v758
    %v760 = vpop.f32.mrb[0].mxu0
    %v761 = vpop.f32.mrb[0].mxu0
    %v762 = vadd.f32 %v698, %v761
    %v763 = vpop.f32.mrb[0].mxu0
    %764 = vmatprep.mubr.bf16.mxu0 0
    %765 = vmatmul.mubr.bf16.gmra.mrb[0].mxu0 %v391
    %v766 = vpop.f32.mrb[0].mxu0
    %v767 = vadd.f32 %v698, %v766
    %v768 = vpop.f32.mrb[0].mxu0
    %v769 = vpop.f32.mrb[0].mxu0
    %v770 = vadd.f32 %v698, %v769
    %v771 = vpop.f32.mrb[0].mxu0
    %772 = vmatprep.mubr.bf16.mxu0 0
    %773 = vmatmul.mubr.bf16.gmra.mrb[0].mxu0 %v392
    %v774 = vpop.f32.mrb[0].mxu0
    %v775 = vadd.f32 %v698, %v774
    %v776 = vpop.f32.mrb[0].mxu0
    %v777 = vpop.f32.mrb[0].mxu0
    %v778 = vadd.f32 %v698, %v777
    %v779 = vpop.f32.mrb[0].mxu0
    %780 = vmatprep.mubr.bf16.mxu0 0
    %781 = vmatmul.mubr.bf16.gmra.mrb[0].mxu0 %v393
    %v782 = vpop.f32.mrb[0].mxu0
    %v783 = vadd.f32 %v698, %v782
    %v784 = vpop.f32.mrb[0].mxu0
    %v785 = vpop.f32.mrb[0].mxu0
    %v786 = vadd.f32 %v698, %v785
    %v787 = vpop.f32.mrb[0].mxu0
    %788 = vmatprep.mubr.bf16.mxu0 0
    %789 = vmatmul.mubr.bf16.gmra.mrb[0].mxu0 %v394
    %v790 = vpop.f32.mrb[0].mxu0
    %v791 = vadd.f32 %v698, %v790
    %v792 = vpop.f32.mrb[0].mxu0
    %v793 = vpop.f32.mrb[0].mxu0
    %v794 = vadd.f32 %v698, %v793
    %v795 = vpop.f32.mrb[0].mxu0
    %796 = vdwg.mxu0
    %v797 = vmax.f32 %v735, 0.0
    %v798 = vmax.f32 %v738, 0.0
    %v799 = vmax.f32 %v743, 0.0
    %v800 = vmax.f32 %v746, 0.0
    %v801 = vmax.f32 %v751, 0.0
    %v802 = vmax.f32 %v754, 0.0
    %v803 = vmax.f32 %v759, 0.0
    %v804 = vmax.f32 %v762, 0.0
    %v805 = vmax.f32 %v767, 0.0
    %v806 = vmax.f32 %v770, 0.0
    %v807 = vmax.f32 %v775, 0.0
    %v808 = vmax.f32 %v778, 0.0
    %v809 = vmax.f32 %v783, 0.0
    %v810 = vmax.f32 %v786, 0.0
    %v811 = vmax.f32 %v791, 0.0
    %v812 = vmax.f32 %v794, 0.0
    %v813 = vpack.c.bf16 %v798, %v797
    %v814 = vpack.c.bf16 %v800, %v799
    %v815 = vpack.c.bf16 %v802, %v801
    %v816 = vpack.c.bf16 %v804, %v803
    %v817 = vpack.c.bf16 %v806, %v805
    %v818 = vpack.c.bf16 %v808, %v807
    %v819 = vpack.c.bf16 %v810, %v809
    %v820 = vpack.c.bf16 %v812, %v811
    %v821 = vld [vmem:[#allocation10] sm:$0xf]
    %v822 = vld [vmem:[#allocation10 + $0x4] sm:$0xf]
    %v823 = vld [vmem:[#allocation10 + $0x8] sm:$0xf]
    %v824 = vld [vmem:[#allocation10 + $0xc] sm:$0xf]
    %v825 = vld [vmem:[#allocation10 + $0x10] sm:$0xf]
    %v826 = vld [vmem:[#allocation10 + $0x14] sm:$0xf]
    %v827 = vld [vmem:[#allocation10 + $0x18] sm:$0xf]
    %v828 = vld [vmem:[#allocation10 + $0x1c] sm:$0xf]
    %v829 = vld [vmem:[#allocation10 + $0x20] sm:$0xf]
    %v830 = vld [vmem:[#allocation10 + $0x24] sm:$0xf]
    %v831 = vld [vmem:[#allocation10 + $0x28] sm:$0xf]
    %v832 = vld [vmem:[#allocation10 + $0x2c] sm:$0xf]
    %v833 = vld [vmem:[#allocation10 + $0x30] sm:$0xf]
    %v834 = vld [vmem:[#allocation10 + $0x34] sm:$0xf]
    %v835 = vld [vmem:[#allocation10 + $0x38] sm:$0xf]
    %v836 = vld [vmem:[#allocation10 + $0x3c] sm:$0xf]
    %v837 = vld [vmem:[%s7] sm:$0x1]
    %v854 = vunpack.c.l.b16 %v821
    %v855 = vunpack.c.l.b16 %v822
    %v856 = vunpack.c.l.b16 %v823
    %v857 = vunpack.c.l.b16 %v824
    %v858 = vunpack.c.l.b16 %v825
    %v859 = vunpack.c.l.b16 %v826
    %v860 = vunpack.c.l.b16 %v827
    %v861 = vunpack.c.l.b16 %v828
    %v862 = vunpack.c.l.b16 %v829
    %v863 = vunpack.c.l.b16 %v830
    %v864 = vunpack.c.l.b16 %v831
    %v865 = vunpack.c.l.b16 %v832
    %v866 = vunpack.c.l.b16 %v833
    %v867 = vunpack.c.l.b16 %v834
    %v868 = vunpack.c.l.b16 %v835
    %v869 = vunpack.c.l.b16 %v836
    %v870 = vpack.c.b16 %v855, %v854
    %v871 = vpack.c.b16 %v857, %v856
    %v872 = vpack.c.b16 %v859, %v858
    %v873 = vpack.c.b16 %v861, %v860
    %v874 = vpack.c.b16 %v863, %v862
    %v875 = vpack.c.b16 %v865, %v864
    %v876 = vpack.c.b16 %v867, %v866
    %v877 = vpack.c.b16 %v869, %v868
    %886 = vmatprep.subr.bf16.mxu0 0
    %887 = vmatpush1.bf16.msra.mxu0 %v870
    %888 = vmatprep.subr.bf16.mxu0 0
    %889 = vmatpush1.bf16.msra.mxu0 %v871
    %890 = vmatprep.subr.bf16.mxu0 0
    %891 = vmatpush1.bf16.msra.mxu0 %v872
    %892 = vmatprep.subr.bf16.mxu0 0
    %893 = vmatpush1.bf16.msra.mxu0 %v873
    %894 = vmatprep.subr.bf16.mxu0 0
    %895 = vmatpush1.bf16.msra.mxu0 %v874
    %896 = vmatprep.subr.bf16.mxu0 0
    %897 = vmatpush1.bf16.msra.mxu0 %v875
    %898 = vmatprep.subr.bf16.mxu0 0
    %899 = vmatpush1.bf16.msra.mxu0 %v876
    %900 = vmatprep.subr.bf16.mxu0 0
    %901 = vmatpush1.bf16.msra.mxu0 %v877
    %902 = vmatprep.subr.bf16.mxu0 0
    %903 = vmatpush1.bf16.msra.mxu0 0
    %904 = vmatprep.subr.bf16.mxu0 0
    %905 = vmatpush1.bf16.msra.mxu0 0
    %906 = vmatprep.subr.bf16.mxu0 0
    %907 = vmatpush1.bf16.msra.mxu0 0
    %908 = vmatprep.subr.bf16.mxu0 0
    %909 = vmatpush1.bf16.msra.mxu0 0
    %910 = vmatprep.subr.bf16.mxu0 0
    %911 = vmatpush1.bf16.msra.mxu0 0
    %912 = vmatprep.subr.bf16.mxu0 0
    %913 = vmatpush1.bf16.msra.mxu0 0
    %914 = vmatprep.subr.bf16.mxu0 0
    %915 = vmatpush1.bf16.msra.mxu0 0
    %916 = vmatprep.subr.bf16.mxu0 0
    %917 = vmatpush1.bf16.msra.mxu0 0
    %918 = vmatprep.mubr.bf16.mxu0 0
    %919 = vmatmul.mubr.bf16.gmra.mrb[0].mxu0 %v813
    %v920 = vpop.f32.mrb[0].mxu0
    %v921 = vadd.f32 0.0, %v920
    %v922 = vpop.f32.mrb[0].mxu0
    %v923 = vpop.f32.mrb[0].mxu0
    %v924 = vadd.f32 0.0, %v923
    %v925 = vpop.f32.mrb[0].mxu0
    %926 = vmatprep.mubr.bf16.mxu0 0
    %927 = vmatmul.mubr.bf16.gmra.mrb[0].mxu0 %v814
    %v928 = vpop.f32.mrb[0].mxu0
    %v929 = vadd.f32 0.0, %v928
    %v930 = vpop.f32.mrb[0].mxu0
    %v931 = vpop.f32.mrb[0].mxu0
    %v932 = vadd.f32 0.0, %v931
    %v933 = vpop.f32.mrb[0].mxu0
    %934 = vmatprep.mubr.bf16.mxu0 0
    %935 = vmatmul.mubr.bf16.gmra.mrb[0].mxu0 %v815
    %v936 = vpop.f32.mrb[0].mxu0
    %v937 = vadd.f32 0.0, %v936
    %v938 = vpop.f32.mrb[0].mxu0
    %v939 = vpop.f32.mrb[0].mxu0
    %v940 = vadd.f32 0.0, %v939
    %v941 = vpop.f32.mrb[0].mxu0
    %942 = vmatprep.mubr.bf16.mxu0 0
    %943 = vmatmul.mubr.bf16.gmra.mrb[0].mxu0 %v816
    %v944 = vpop.f32.mrb[0].mxu0
    %v945 = vadd.f32 0.0, %v944
    %v946 = vpop.f32.mrb[0].mxu0
    %v947 = vpop.f32.mrb[0].mxu0
    %v948 = vadd.f32 0.0, %v947
    %v949 = vpop.f32.mrb[0].mxu0
    %950 = vmatprep.mubr.bf16.mxu0 0
    %951 = vmatmul.mubr.bf16.gmra.mrb[0].mxu0 %v817
    %v952 = vpop.f32.mrb[0].mxu0
    %v953 = vadd.f32 0.0, %v952
    %v954 = vpop.f32.mrb[0].mxu0
    %v955 = vpop.f32.mrb[0].mxu0
    %v956 = vadd.f32 0.0, %v955
    %v957 = vpop.f32.mrb[0].mxu0
    %958 = vmatprep.mubr.bf16.mxu0 0
    %959 = vmatmul.mubr.bf16.gmra.mrb[0].mxu0 %v818
    %v960 = vpop.f32.mrb[0].mxu0
    %v961 = vadd.f32 0.0, %v960
    %v962 = vpop.f32.mrb[0].mxu0
    %v963 = vpop.f32.mrb[0].mxu0
    %v964 = vadd.f32 0.0, %v963
    %v965 = vpop.f32.mrb[0].mxu0
    %966 = vmatprep.mubr.bf16.mxu0 0
    %967 = vmatmul.mubr.bf16.gmra.mrb[0].mxu0 %v819
    %v968 = vpop.f32.mrb[0].mxu0
    %v969 = vadd.f32 0.0, %v968
    %v970 = vpop.f32.mrb[0].mxu0
    %v971 = vpop.f32.mrb[0].mxu0
    %v972 = vadd.f32 0.0, %v971
    %v973 = vpop.f32.mrb[0].mxu0
    %974 = vmatprep.mubr.bf16.mxu0 0
    %975 = vmatmul.mubr.bf16.gmra.mrb[0].mxu0 %v820
    %v976 = vpop.f32.mrb[0].mxu0
    %v977 = vadd.f32 0.0, %v976
    %v978 = vpop.f32.mrb[0].mxu0
    %v979 = vpop.f32.mrb[0].mxu0
    %v980 = vadd.f32 0.0, %v979
    %v981 = vpop.f32.mrb[0].mxu0
    %982 = vdwg.mxu0
    %v983 = vpack.c.bf16 %v924, %v921
    %v984 = vpack.c.bf16 %v932, %v929
    %v985 = vpack.c.bf16 %v940, %v937
    %v986 = vpack.c.bf16 %v948, %v945
    %v987 = vpack.c.bf16 %v956, %v953
    %v988 = vpack.c.bf16 %v964, %v961
    %v989 = vpack.c.bf16 %v972, %v969
    %v990 = vpack.c.bf16 %v980, %v977
    %v992 = vlaneseq
    %v993 = vshrl.u32 %v992, 7
    %v994 = vsub.s32 0, %v993
    %v995 = vrot.slane %v837, %v994
    %997 = vmatprep.subr.bf16.mxu0 0
    %998 = vmatpush1.bf16.msra.mxu0 %v983
    %999 = vmatprep.subr.bf16.mxu0 0
    %1000 = vmatpush1.bf16.msra.mxu0 %v984
    %1001 = vmatprep.subr.bf16.mxu0 0
    %1002 = vmatpush1.bf16.msra.mxu0 %v985
    %1003 = vmatprep.subr.bf16.mxu0 0
    %1004 = vmatpush1.bf16.msra.mxu0 %v986
    %1005 = vmatprep.subr.bf16.mxu0 0
    %1006 = vmatpush1.bf16.msra.mxu0 %v987
    %1007 = vmatprep.subr.bf16.mxu0 0
    %1008 = vmatpush1.bf16.msra.mxu0 %v988
    %1009 = vmatprep.subr.bf16.mxu0 0
    %1010 = vmatpush1.bf16.msra.mxu0 %v989
    %1011 = vmatprep.subr.bf16.mxu0 0
    %1012 = vmatpush1.bf16.msra.mxu0 %v990
    %1013 = vmatprep.subr.bf16.mxu0 0
    %1014 = vmatpush1.bf16.msra.mxu0 0
    %1015 = vmatprep.subr.bf16.mxu0 0
    %1016 = vmatpush1.bf16.msra.mxu0 0
    %1017 = vmatprep.subr.bf16.mxu0 0
    %1018 = vmatpush1.bf16.msra.mxu0 0
    %1019 = vmatprep.subr.bf16.mxu0 0
    %1020 = vmatpush1.bf16.msra.mxu0 0
    %1021 = vmatprep.subr.bf16.mxu0 0
    %1022 = vmatpush1.bf16.msra.mxu0 0
    %1023 = vmatprep.subr.bf16.mxu0 0
    %1024 = vmatpush1.bf16.msra.mxu0 0
    %1025 = vmatprep.subr.bf16.mxu0 0
    %1026 = vmatpush1.bf16.msra.mxu0 0
    %1027 = vmatprep.subr.bf16.mxu0 0
    %1028 = vmatpush1.bf16.msra.mxu0 0
    %1029 = vmatprep.mubr.bf16.mxu0 0
    %1030 = vmatmul.mubr.bf16.gmra.mrb[0].mxu0 %v387
    %v1031 = vpop.f32.mrb[0].mxu0
    %v1032 = vadd.f32 %v995, %v1031
    %v1033 = vpop.f32.mrb[0].mxu0
    %v1034 = vpop.f32.mrb[0].mxu0
    %v1035 = vadd.f32 %v995, %v1034
    %v1036 = vpop.f32.mrb[0].mxu0
    %1037 = vmatprep.mubr.bf16.mxu0 0
    %1038 = vmatmul.mubr.bf16.gmra.mrb[0].mxu0 %v388
    %v1039 = vpop.f32.mrb[0].mxu0
    %v1040 = vadd.f32 %v995, %v1039
    %v1041 = vpop.f32.mrb[0].mxu0
    %v1042 = vpop.f32.mrb[0].mxu0
    %v1043 = vadd.f32 %v995, %v1042
    %v1044 = vpop.f32.mrb[0].mxu0
    %1045 = vmatprep.mubr.bf16.mxu0 0
    %1046 = vmatmul.mubr.bf16.gmra.mrb[0].mxu0 %v389
    %v1047 = vpop.f32.mrb[0].mxu0
    %v1048 = vadd.f32 %v995, %v1047
    %v1049 = vpop.f32.mrb[0].mxu0
    %v1050 = vpop.f32.mrb[0].mxu0
    %v1051 = vadd.f32 %v995, %v1050
    %v1052 = vpop.f32.mrb[0].mxu0
    %1053 = vmatprep.mubr.bf16.mxu0 0
    %1054 = vmatmul.mubr.bf16.gmra.mrb[0].mxu0 %v390
    %v1055 = vpop.f32.mrb[0].mxu0
    %v1056 = vadd.f32 %v995, %v1055
    %v1057 = vpop.f32.mrb[0].mxu0
    %v1058 = vpop.f32.mrb[0].mxu0
    %v1059 = vadd.f32 %v995, %v1058
    %v1060 = vpop.f32.mrb[0].mxu0
    %1061 = vmatprep.mubr.bf16.mxu0 0
    %1062 = vmatmul.mubr.bf16.gmra.mrb[0].mxu0 %v391
    %v1063 = vpop.f32.mrb[0].mxu0
    %v1064 = vadd.f32 %v995, %v1063
    %v1065 = vpop.f32.mrb[0].mxu0
    %v1066 = vpop.f32.mrb[0].mxu0
    %v1067 = vadd.f32 %v995, %v1066
    %v1068 = vpop.f32.mrb[0].mxu0
    %1069 = vmatprep.mubr.bf16.mxu0 0
    %1070 = vmatmul.mubr.bf16.gmra.mrb[0].mxu0 %v392
    %v1071 = vpop.f32.mrb[0].mxu0
    %v1072 = vadd.f32 %v995, %v1071
    %v1073 = vpop.f32.mrb[0].mxu0
    %v1074 = vpop.f32.mrb[0].mxu0
    %v1075 = vadd.f32 %v995, %v1074
    %v1076 = vpop.f32.mrb[0].mxu0
    %1077 = vmatprep.mubr.bf16.mxu0 0
    %1078 = vmatmul.mubr.bf16.gmra.mrb[0].mxu0 %v393
    %v1079 = vpop.f32.mrb[0].mxu0
    %v1080 = vadd.f32 %v995, %v1079
    %v1081 = vpop.f32.mrb[0].mxu0
    %v1082 = vpop.f32.mrb[0].mxu0
    %v1083 = vadd.f32 %v995, %v1082
    %v1084 = vpop.f32.mrb[0].mxu0
    %1085 = vmatprep.mubr.bf16.mxu0 0
    %1086 = vmatmul.mubr.bf16.gmra.mrb[0].mxu0 %v394
    %v1087 = vpop.f32.mrb[0].mxu0
    %v1088 = vadd.f32 %v995, %v1087
    %v1089 = vpop.f32.mrb[0].mxu0
    %v1090 = vpop.f32.mrb[0].mxu0
    %v1091 = vadd.f32 %v995, %v1090
    %v1092 = vpop.f32.mrb[0].mxu0
    %1093 = vdwg.mxu0
    %1094 = vst [vmem:[#allocation11] sm:$0xff] %v1032
    %1095 = vst [vmem:[#allocation11 + $0x8] sm:$0xff] %v1035
    %1096 = vst [vmem:[#allocation11 + $0x10] sm:$0xff] %v1040
    %1097 = vst [vmem:[#allocation11 + $0x18] sm:$0xff] %v1043
    %1098 = vst [vmem:[#allocation11 + $0x20] sm:$0xff] %v1048
    %1099 = vst [vmem:[#allocation11 + $0x28] sm:$0xff] %v1051
    %1100 = vst [vmem:[#allocation11 + $0x30] sm:$0xff] %v1056
    %1101 = vst [vmem:[#allocation11 + $0x38] sm:$0xff] %v1059
    %1102 = vst [vmem:[#allocation11 + $0x40] sm:$0xff] %v1064
    %1103 = vst [vmem:[#allocation11 + $0x48] sm:$0xff] %v1067
    %1104 = vst [vmem:[#allocation11 + $0x50] sm:$0xff] %v1072
    %1105 = vst [vmem:[#allocation11 + $0x58] sm:$0xff] %v1075
    %1106 = vst [vmem:[#allocation11 + $0x60] sm:$0xff] %v1080
    %1107 = vst [vmem:[#allocation11 + $0x68] sm:$0xff] %v1083
    %1108 = vst [vmem:[#allocation11 + $0x70] sm:$0xff] %v1088
    %1109 = vst [vmem:[#allocation11 + $0x78] sm:$0xff] %v1091
    // Predicated region
    $region54: #{tpu_custom_call.1} parent=1 // pred_check
      _
    $region55: #{tpu_custom_call.1} parent=1 // pred_check_branch
      %1111 = sbr.rel (0) target = $region57
    $region56: #{tpu_custom_call.1} parent=1 // pred_region
      %s1113 = ssub.s32 2048, 2048
      %1114 = vsyncadd [#allocation4], %s1113
      %s1115 = sshll.u32 [#allocation11], 4
      %s1116 = int_to_ptr.vmem [resolvable:$true] %s1115
      %1121 = dma.vmem_to_hbm [thread:$0]  %s1116, 2048, %s8, [#allocation4], 128, 128, 8
    $region57: #{tpu_custom_call.1} parent=1 // pred_fallthru
      _
    // Predicated region
    $region58: #{tpu_custom_call.1} parent=1 // pred_check
      _
    $region59: #{tpu_custom_call.1} parent=1 // pred_check_branch
      %1123 = sbr.rel (0) target = $region61
    $region60: #{tpu_custom_call.1} parent=1 // pred_region
      %1124 = dma.done [#allocation4], 2048
    $region61: #{tpu_custom_call.1} parent=1 // pred_fallthru
      _
    %1125 = vsyncpa [#allocation3], 1
    %1126 = vsyncpa [#allocation6], 1
    %1127 = vsyncpa [#allocation9], 1
    %1128 = vsyncpa [#allocation4], 1

</llo_original>
